<compile_context>
chip_gen: v6e
topology: v6e:2x2x1
jax: 0.10.0
libtpu: 0.0.40
codegen_flags: <defaults>
</compile_context>

<pallas_src>
import jax
import jax.numpy as jnp
from jax import lax
from jax.experimental import pallas as pl
from jax.experimental.pallas import tpu as pltpu


def _cdiv(a, b):
    return -(-a // b)


def _round_up(x, m):
    return _cdiv(x, m) * m


def _has_bf16_eup():
    """bf16 EUP exists on v6e / v7x; v5e and older (and unknown) -> f32 math."""
    try:
        kind = jax.devices()[0].device_kind.lower()
    except Exception:
        return False
    return any(tag in kind for tag in ("v6", "v7", "7x", "trillium"))


def _choose_tiles(N, C, itemsize):
    """(tile_n, chunk): DMA row tile sized by bytes, compute chunk sized by vregs."""
    # Inner row chunk: keep (chunk, C) f32 temporaries around <= 1 MiB, <= 512 rows.
    chunk = (1 << 20) // max(1, C * 4)
    chunk = max(8, min(512, chunk))
    chunk = min(chunk, _round_up(N, 8))
    chunk = max(8, (chunk // 8) * 8)
    # DMA row tile: ~6 MiB of scores per pipeline buffer (double-buffered by Pallas).
    t = (6 << 20) // max(1, C * itemsize)
    t = max(chunk, (t // chunk) * chunk)
    t = min(t, _round_up(N, chunk))
    return t, chunk


def _make_wlse_kernel(n_rows, tile_n, chunk, exp_dtype, mask_rows):
    """Kernel computing, per row tile, sum_r w_r * logsumexp(scores_r)."""
    n_chunks = tile_n // chunk

    def kernel(scores_ref, w_ref, out_ref):
        row0 = pl.program_id(0) * tile_n

        def body(j, acc):
            c0 = pl.multiple_of(j * chunk, chunk)
            s = scores_ref[pl.ds(c0, chunk), :]                       # (chunk, C)
            if mask_rows:
                rid = row0 + c0 + lax.broadcasted_iota(jnp.int32, (chunk, 1), 0)
                s = jnp.where(rid < n_rows, s, jnp.zeros_like(s))
            sc = s.astype(exp_dtype)
            m = jnp.max(sc, axis=-1, keepdims=True)                   # (chunk, 1)
            e = jnp.exp(sc - m)                                       # (chunk, C)
            ssum = jnp.sum(e.astype(jnp.float32), axis=-1, keepdims=True)
            lse = m.astype(jnp.float32) + jnp.log(ssum)               # (chunk, 1) f32
            # Lane-dense weights for this chunk; combine with the (chunk,1) lse
            # column via the (idle) MXU instead of a sublane<->lane relayout.
            w2d = w_ref[0, pl.ds(j, 1), :].astype(jnp.float32)        # (1, chunk)
            return acc + jnp.dot(w2d, lse, preferred_element_type=jnp.float32)

        acc = lax.fori_loop(0, n_chunks, body, jnp.zeros((1, 1), jnp.float32),
                            unroll=n_chunks <= 8)
        out_ref[...] = jnp.broadcast_to(acc, out_ref.shape)

    return kernel


def _wlse_sum_pallas(scores, w_row, exp_dtype):
    """sum_r w_r * logsumexp(scores_r) over all rows, via the Pallas kernel."""
    N, C = scores.shape
    itemsize = jnp.dtype(scores.dtype).itemsize
    tile_n, chunk = _choose_tiles(N, C, itemsize)
    n_chunks = tile_n // chunk
    grid_n = _cdiv(N, tile_n)
    n_pad = grid_n * tile_n
    mask_rows = n_pad != N

    # O(N) weight padding / repack only (the big scores array is never copied).
    w_pad = w_row if n_pad == N else jnp.pad(w_row, (0, n_pad - N))
    w3 = w_pad.reshape(grid_n, n_chunks, chunk)

    # VMEM footprint: 2 pipeline buffers per input + bounded compute temporaries.
    scores_buf = tile_n * C * itemsize
    w_buf = _round_up(n_chunks, 8) * _round_up(chunk, 128) * 4
    compute = 6 * chunk * max(C, 128) * 4
    vmem_limit = int(1.25 * (2 * (scores_buf + w_buf) + compute)) + (2 << 20)
    vmem_limit = min(48 << 20, max(16 << 20, vmem_limit))

    kernel = _make_wlse_kernel(N, tile_n, chunk, exp_dtype, mask_rows)
    out = pl.pallas_call(
        kernel,
        out_shape=jax.ShapeDtypeStruct((grid_n, 1, 128), jnp.float32),
        grid_spec=pltpu.PrefetchScalarGridSpec(
            num_scalar_prefetch=0,
            grid=(grid_n,),
            in_specs=[
                pl.BlockSpec((tile_n, C), lambda i: (i, 0)),          # scores (native dtype)
                pl.BlockSpec((1, n_chunks, chunk), lambda i: (i, 0, 0)),  # lane-dense weights
            ],
            out_specs=pl.BlockSpec((1, 1, 128), lambda i: (i, 0, 0)),  # per-tile partial
        ),
        compiler_params=pltpu.CompilerParams(
            dimension_semantics=("parallel",),   # independent row tiles (v7x 2-TC)
            vmem_limit_bytes=vmem_limit,
        ),
    )(scores, w3)
    return jnp.sum(out[:, 0, 0])


class HeadTargetLayer:
    """JAX/Pallas port of the PyTorch HeadTargetLayer (cross-entropy head)."""

    def __init__(self, ncls=1, min_pallas_classes=32, bf16_exp=True):
        self.ncls = ncls  # kept for API parity; unused in forward (as in PyTorch)
        self.min_pallas_classes = min_pallas_classes
        self.bf16_exp = bf16_exp

    def __call__(self, cls_scores, gt_clses, weights=None, force_pallas=False):
        N, C = cls_scores.shape
        gt = gt_clses.astype(jnp.int32)
        # NOTE: out-of-range targets are clamped by the XLA gather; PyTorch would raise.
        if weights is None:
            w_row = jnp.ones((N,), jnp.float32)
        else:
            w_row = weights.astype(jnp.float32)[gt]

        # O(N) pieces in XLA: picked target logit, weighted-picked sum, denominator.
        picked = jnp.take_along_axis(cls_scores, gt[:, None], axis=1)[:, 0]
        picked = picked.astype(jnp.float32)
        sum_w_picked = jnp.sum(w_row * picked)
        sum_w = jnp.sum(w_row)

        if force_pallas or C >= self.min_pallas_classes:
            if (cls_scores.dtype == jnp.bfloat16) and self.bf16_exp and _has_bf16_eup():
                exp_dtype = jnp.bfloat16   # native bf16 EUP (v6e / v7x)
            else:
                exp_dtype = jnp.float32
            sum_w_lse = _wlse_sum_pallas(cls_scores, w_row, exp_dtype)
        else:
            # Tiny-C fallback: a Pallas kernel would use at most C/128 of each lane op.
            lse = jax.nn.logsumexp(cls_scores.astype(jnp.float32), axis=-1)
            sum_w_lse = jnp.sum(w_row * lse)

        # loss = sum_r w_r * (lse_r - picked_r) / sum_r w_r
        return (sum_w_lse - sum_w_picked) / sum_w


def _reference_ce(cls_scores, gt_clses, weights=None):
    """Pure-JAX reference matching torch.nn.functional.cross_entropy."""
    N, C = cls_scores.shape
    w = jnp.ones((C,), jnp.float32) if weights is None else weights.astype(jnp.float32)
    logp = jax.nn.log_softmax(cls_scores.astype(jnp.float32), axis=-1)
    picked = jnp.take_along_axis(logp, gt_clses[:, None].astype(jnp.int32), axis=1)[:, 0]
    w_row = w[gt_clses]
    return jnp.sum(-w_row * picked) / jnp.sum(w_row)


if __name__ == "__main__":
    key = jax.random.PRNGKey(0)
    k1, k2, k3, k4, k5 = jax.random.split(key, 5)

    layer = HeadTargetLayer(ncls=128)

    # 1) f32, N divisible by the row chunk; unweighted and class-weighted.
    N1, C1 = 256, 128
    s1 = jax.random.normal(k1, (N1, C1), dtype=jnp.float32)
    g1 = jax.random.randint(k2, (N1,), 0, C1, dtype=jnp.int32)
    wc1 = jax.random.uniform(k3, (C1,), dtype=jnp.float32) + 0.5
    out_a = jax.block_until_ready(layer(s1, g1))
    out_b = jax.block_until_ready(layer(s1, g1, weights=wc1))
    ref_a = _reference_ce(s1, g1)
    ref_b = _reference_ce(s1, g1, wc1)
    assert jnp.allclose(out_a, ref_a, atol=1e-4, rtol=1e-4), (out_a, ref_a)
    assert jnp.allclose(out_b, ref_b, atol=1e-4, rtol=1e-4), (out_b, ref_b)

    # 2) bf16 scores, ragged N (exercises the in-kernel row mask) + weights.
    N2, C2 = 173, 64
    s2 = jax.random.normal(k4, (N2, C2), dtype=jnp.bfloat16)
    g2 = jax.random.randint(k5, (N2,), 0, C2, dtype=jnp.int32)
    wc2 = jax.random.uniform(k3, (C2,), dtype=jnp.float32) + 0.5
    out_c = jax.block_until_ready(layer(s2, g2, weights=wc2))
    ref_c = _reference_ce(s2.astype(jnp.float32), g2, wc2)
    assert jnp.allclose(out_c, ref_c, atol=1e-2, rtol=1e-2), (out_c, ref_c)

    # 3) multi-tile / multi-chunk path (grid_n = 2, several inner chunks).
    N3, C3 = 4000, 512
    s3 = jax.random.normal(k4, (N3, C3), dtype=jnp.float32)
    g3 = jax.random.randint(k5, (N3,), 0, C3, dtype=jnp.int32)
    out_d = jax.block_until_ready(layer(s3, g3))
    ref_d = _reference_ce(s3, g3)
    assert jnp.allclose(out_d, ref_d, atol=1e-4, rtol=1e-4), (out_d, ref_d)

    # 4) tiny C: default dispatch -> XLA fallback; force_pallas exercises the
    #    kernel's small-C / masked-row edge path.
    N4, C4 = 50, 4
    s4 = jax.random.normal(k1, (N4, C4), dtype=jnp.float32)
    g4 = jax.random.randint(k2, (N4,), 0, C4, dtype=jnp.int32)
    out_e = jax.block_until_ready(layer(s4, g4))                     # XLA path
    out_f = jax.block_until_ready(layer(s4, g4, force_pallas=True))  # Pallas path
    ref_e = _reference_ce(s4, g4)
    assert jnp.allclose(out_e, ref_e, atol=1e-4, rtol=1e-4), (out_e, ref_e)
    assert jnp.allclose(out_f, ref_e, atol=1e-4, rtol=1e-4), (out_f, ref_e)

    print("KERNEL_OK")
</pallas_src>

<mosaic_0001>
module attributes {stable_mosaic.version = 11 : i64} {
  func.func @kernel(%arg0: i32, %arg1: memref<256x128xf32, #tpu.memory_space<vmem>>, %arg2: memref<1x1x256xf32, #tpu.memory_space<vmem>>, %arg3: memref<1x1x128xf32, #tpu.memory_space<vmem>>) attributes {dimension_semantics = [#tpu.dimension_semantics<parallel>], iteration_bounds = array<i64: 1>, scalar_prefetch = 0 : i64, scratch_operands = 0 : i64, tpu.core_type = #tpu.core_type<tc>, window_params = [{transform_indices = @transform_0, window_bounds = array<i64: 256, 128>}, {transform_indices = @transform_1, window_bounds = array<i64: 1, 1, 256>}, {transform_indices = @transform_2, window_bounds = array<i64: 1, 1, 128>}]} {
    %cst = arith.constant 0.000000e+00 : f32
    %0 = vector.broadcast %cst : f32 to vector<1x1xf32>
    %c0_i32 = arith.constant 0 : i32
    %c256_i32 = arith.constant 256 : i32
    %1 = arith.muli %c0_i32, %c256_i32 : i32
    %2 = tpu.assume_multiple %1, 256 : i32
    %3 = arith.index_cast %2 : i32 to index
    %c0 = arith.constant 0 : index
    %4 = vector.load %arg1[%3, %c0] : memref<256x128xf32, #tpu.memory_space<vmem>>, vector<256x128xf32>
    %cst_0 = arith.constant dense<0xFF800000> : vector<256xf32>
    %5 = vector.multi_reduction <maximumf>, %4, %cst_0 [1] : vector<256x128xf32> to vector<256xf32>
    %6 = vector.shape_cast %5 : vector<256xf32> to vector<256x1xf32>
    %7 = vector.broadcast %6 : vector<256x1xf32> to vector<256x128xf32>
    %8 = arith.subf %4, %7 : vector<256x128xf32>
    %9 = math.exp %8 : vector<256x128xf32>
    %cst_1 = arith.constant dense<0.000000e+00> : vector<256xf32>
    %10 = vector.multi_reduction <add>, %9, %cst_1 [1] : vector<256x128xf32> to vector<256xf32>
    %11 = vector.shape_cast %10 : vector<256xf32> to vector<256x1xf32>
    %12 = math.log %11 : vector<256x1xf32>
    %13 = arith.addf %6, %12 : vector<256x1xf32>
    %c0_2 = arith.constant 0 : index
    %14 = arith.index_cast %c0_i32 : i32 to index
    %c0_3 = arith.constant 0 : index
    %15 = vector.load %arg2[%c0_2, %14, %c0_3] : memref<1x1x256xf32, #tpu.memory_space<vmem>>, vector<1x1x256xf32>
    %16 = vector.shape_cast %15 : vector<1x1x256xf32> to vector<1x256xf32>
    %cst_4 = arith.constant dense<0.000000e+00> : vector<1x1xf32>
    %17 = tpu.matmul %16, %13, %cst_4 {dimension_numbers = #tpu.dot_dimension_numbers<[1], [0], [0], [1], [0, 0, 1, 1], [], []>} : vector<1x256xf32>, vector<256x1xf32>, vector<1x1xf32> -> vector<1x1xf32>
    %18 = arith.addf %0, %17 : vector<1x1xf32>
    %c1_i32 = arith.constant 1 : i32
    %19 = vector.shape_cast %18 : vector<1x1xf32> to vector<1x1x1xf32>
    %20 = vector.broadcast %19 : vector<1x1x1xf32> to vector<1x1x128xf32>
    %c0_5 = arith.constant 0 : index
    %c0_6 = arith.constant 0 : index
    %c0_7 = arith.constant 0 : index
    %21 = vector.load %arg3[%c0_5, %c0_6, %c0_7] : memref<1x1x128xf32, #tpu.memory_space<vmem>>, vector<1x1x128xf32>
    tpu.vector_store %arg3[%c0_5, %c0_6, %c0_7], %20 {strides = array<i32>} : memref<1x1x128xf32, #tpu.memory_space<vmem>>, vector<1x1x128xf32>,
    return
  }
  func.func @transform_0(%arg0: i32) -> (i32, i32) {
    %c0_i32 = arith.constant 0 : i32
    %c0_i32_0 = arith.constant 0 : i32
    return %arg0, %c0_i32 : i32, i32
  }
  func.func @transform_1(%arg0: i32) -> (i32, i32, i32) {
    %c0_i32 = arith.constant 0 : i32
    %c0_i32_0 = arith.constant 0 : i32
    %c0_i32_1 = arith.constant 0 : i32
    return %arg0, %c0_i32, %c0_i32_0 : i32, i32, i32
  }
  func.func @transform_2(%arg0: i32) -> (i32, i32, i32) {
    %c0_i32 = arith.constant 0 : i32
    %c0_i32_0 = arith.constant 0 : i32
    %c0_i32_1 = arith.constant 0 : i32
    return %arg0, %c0_i32, %c0_i32_0 : i32, i32, i32
  }
}

</mosaic_0001>

<llo_original>
// kernel: tpu_custom_call.1
$region0: #{tpu_custom_call.1}
  #allocation0 [shape = 'u32[]', space=smem, size = 0x4, offset = 0x4, fixed_abs, tag = 'smem constant byte address 0x4 - core index']
  #allocation1 [shape = 'u32[144,128]{1,0:T(1,128)}', space=vmem, size = 0x12000, scoped, tag = 'internal scratch']
  %s0 = inlined_call_operand.hbm [shape: f32[256,128], index: 0, kind: input, shape index: {}]
  %s1 = inlined_call_operand.hbm [shape: f32[1,1,256], index: 1, kind: input, shape index: {}]
  %s2 = inlined_call_operand.hbm [shape: f32[1,1,128], index: 2, kind: output, shape index: {}]
  %s3 = sld [smem:[#allocation0]]
  $region26: #{tpu_custom_call.1} parent=0
    _
  %s5 = ssub.s32 1, %s3
  %s6 = scalar_select 0, %s5, %s3
  $region1: #{tpu_custom_call.1} parent=0
    #allocation2 [shape = 'u8[131072]{0}', space=vmem, size = 0x20000, scoped, tag = 'input window, operand 0, single buffered']
    #allocation3 [shape = 's32[1]{0}', space=sflag, size = 0x4, scoped, tag = 'scoped memory for tpu_custom_call.1']
    #allocation4 [shape = 's32[1]{0}', space=sflag, size = 0x4, scoped, tag = 'scoped memory for tpu_custom_call.1']
    #allocation5 [shape = 'u8[1024]{0}', space=vmem, size = 0x400, scoped, tag = 'input window, operand 1, single buffered']
    #allocation6 [shape = 's32[1]{0}', space=sflag, size = 0x4, scoped, tag = 'scoped memory for tpu_custom_call.1']
    #allocation7 [shape = 'u8[512]{0}', space=vmem, size = 0x400, scoped, tag = 'output window, operand 0, single buffered']
    %7 = vsyncpa [#allocation3], 0
    %8 = vsyncpa [#allocation6], 0
    %9 = vsyncpa [#allocation4], 0
    // Predicated region
    $region2: #{tpu_custom_call.1} parent=1 // pred_check
      _
    $region3: #{tpu_custom_call.1} parent=1 // pred_check_branch
      %11 = sbr.rel (0) target = $region5
    $region4: #{tpu_custom_call.1} parent=1 // pred_region
      %s13 = ssub.s32 4096, 4096
      %14 = vsyncadd [#allocation3], %s13
      %s15 = sshll.u32 [#allocation2], 4
      %s16 = int_to_ptr.vmem [resolvable:$true] %s15
      %21 = dma.hbm_to_vmem [thread:$0]  %s0, 4096, %s16, [#allocation3], 128, 128, 8
    $region5: #{tpu_custom_call.1} parent=1 // pred_fallthru
      _
    // Predicated region
    $region6: #{tpu_custom_call.1} parent=1 // pred_check
      _
    $region7: #{tpu_custom_call.1} parent=1 // pred_check_branch
      %23 = sbr.rel (0) target = $region9
    $region8: #{tpu_custom_call.1} parent=1 // pred_region
      %s25 = ssub.s32 32, 32
      %26 = vsyncadd [#allocation6], %s25
      %s28 = sshll.u32 [#allocation5], 4
      %s29 = int_to_ptr.vmem [resolvable:$true] %s28
      %31 = dma.hbm_to_vmem [thread:$0]  %s1, 32, %s29, [#allocation6]
    $region9: #{tpu_custom_call.1} parent=1 // pred_fallthru
      _
    // Predicated region
    $region10: #{tpu_custom_call.1} parent=1 // pred_check
      _
    $region11: #{tpu_custom_call.1} parent=1 // pred_check_branch
      %33 = sbr.rel (0) target = $region13
    $region12: #{tpu_custom_call.1} parent=1 // pred_region
      %34 = dma.done [#allocation3], 4096
    $region13: #{tpu_custom_call.1} parent=1 // pred_fallthru
      _
    // Predicated region
    $region14: #{tpu_custom_call.1} parent=1 // pred_check
      _
    $region15: #{tpu_custom_call.1} parent=1 // pred_check_branch
      %36 = sbr.rel (0) target = $region17
    $region16: #{tpu_custom_call.1} parent=1 // pred_region
      %37 = dma.done [#allocation6], 32
    $region17: #{tpu_custom_call.1} parent=1 // pred_fallthru
      _
    %v38 = vld [vmem:[#allocation2] sm:$0xff]
    %v39 = vld [vmem:[#allocation2 + $0x8] sm:$0xff]
    %v40 = vld [vmem:[#allocation2 + $0x10] sm:$0xff]
    %v41 = vld [vmem:[#allocation2 + $0x18] sm:$0xff]
    %v42 = vld [vmem:[#allocation2 + $0x20] sm:$0xff]
    %v43 = vld [vmem:[#allocation2 + $0x28] sm:$0xff]
    %v44 = vld [vmem:[#allocation2 + $0x30] sm:$0xff]
    %v45 = vld [vmem:[#allocation2 + $0x38] sm:$0xff]
    %v46 = vld [vmem:[#allocation2 + $0x40] sm:$0xff]
    %v47 = vld [vmem:[#allocation2 + $0x48] sm:$0xff]
    %v48 = vld [vmem:[#allocation2 + $0x50] sm:$0xff]
    %v49 = vld [vmem:[#allocation2 + $0x58] sm:$0xff]
    %v50 = vld [vmem:[#allocation2 + $0x60] sm:$0xff]
    %v51 = vld [vmem:[#allocation2 + $0x68] sm:$0xff]
    %v52 = vld [vmem:[#allocation2 + $0x70] sm:$0xff]
    %v53 = vld [vmem:[#allocation2 + $0x78] sm:$0xff]
    %v54 = vld [vmem:[#allocation2 + $0x80] sm:$0xff]
    %v55 = vld [vmem:[#allocation2 + $0x88] sm:$0xff]
    %v56 = vld [vmem:[#allocation2 + $0x90] sm:$0xff]
    %v57 = vld [vmem:[#allocation2 + $0x98] sm:$0xff]
    %v58 = vld [vmem:[#allocation2 + $0xa0] sm:$0xff]
    %v59 = vld [vmem:[#allocation2 + $0xa8] sm:$0xff]
    %v60 = vld [vmem:[#allocation2 + $0xb0] sm:$0xff]
    %v61 = vld [vmem:[#allocation2 + $0xb8] sm:$0xff]
    %v62 = vld [vmem:[#allocation2 + $0xc0] sm:$0xff]
    %v63 = vld [vmem:[#allocation2 + $0xc8] sm:$0xff]
    %v64 = vld [vmem:[#allocation2 + $0xd0] sm:$0xff]
    %v65 = vld [vmem:[#allocation2 + $0xd8] sm:$0xff]
    %v66 = vld [vmem:[#allocation2 + $0xe0] sm:$0xff]
    %v67 = vld [vmem:[#allocation2 + $0xe8] sm:$0xff]
    %v68 = vld [vmem:[#allocation2 + $0xf0] sm:$0xff]
    %v69 = vld [vmem:[#allocation2 + $0xf8] sm:$0xff]
    %70 = vmax.xlane.f32.xlu0 %v38
    %v71 = vpop.xlane.xlu0 %70
    %72 = vmax.xlane.f32.xlu0 %v39
    %v73 = vpop.xlane.xlu0 %72
    %74 = vmax.xlane.f32.xlu0 %v40
    %v75 = vpop.xlane.xlu0 %74
    %76 = vmax.xlane.f32.xlu0 %v41
    %v77 = vpop.xlane.xlu0 %76
    %78 = vmax.xlane.f32.xlu0 %v42
    %v79 = vpop.xlane.xlu0 %78
    %80 = vmax.xlane.f32.xlu0 %v43
    %v81 = vpop.xlane.xlu0 %80
    %82 = vmax.xlane.f32.xlu0 %v44
    %v83 = vpop.xlane.xlu0 %82
    %84 = vmax.xlane.f32.xlu0 %v45
    %v85 = vpop.xlane.xlu0 %84
    %86 = vmax.xlane.f32.xlu0 %v46
    %v87 = vpop.xlane.xlu0 %86
    %88 = vmax.xlane.f32.xlu0 %v47
    %v89 = vpop.xlane.xlu0 %88
    %90 = vmax.xlane.f32.xlu0 %v48
    %v91 = vpop.xlane.xlu0 %90
    %92 = vmax.xlane.f32.xlu0 %v49
    %v93 = vpop.xlane.xlu0 %92
    %94 = vmax.xlane.f32.xlu0 %v50
    %v95 = vpop.xlane.xlu0 %94
    %96 = vmax.xlane.f32.xlu0 %v51
    %v97 = vpop.xlane.xlu0 %96
    %98 = vmax.xlane.f32.xlu0 %v52
    %v99 = vpop.xlane.xlu0 %98
    %100 = vmax.xlane.f32.xlu0 %v53
    %v101 = vpop.xlane.xlu0 %100
    %102 = vmax.xlane.f32.xlu0 %v54
    %v103 = vpop.xlane.xlu0 %102
    %104 = vmax.xlane.f32.xlu0 %v55
    %v105 = vpop.xlane.xlu0 %104
    %106 = vmax.xlane.f32.xlu0 %v56
    %v107 = vpop.xlane.xlu0 %106
    %108 = vmax.xlane.f32.xlu0 %v57
    %v109 = vpop.xlane.xlu0 %108
    %110 = vmax.xlane.f32.xlu0 %v58
    %v111 = vpop.xlane.xlu0 %110
    %112 = vmax.xlane.f32.xlu0 %v59
    %v113 = vpop.xlane.xlu0 %112
    %114 = vmax.xlane.f32.xlu0 %v60
    %v115 = vpop.xlane.xlu0 %114
    %116 = vmax.xlane.f32.xlu0 %v61
    %v117 = vpop.xlane.xlu0 %116
    %118 = vmax.xlane.f32.xlu0 %v62
    %v119 = vpop.xlane.xlu0 %118
    %120 = vmax.xlane.f32.xlu0 %v63
    %v121 = vpop.xlane.xlu0 %120
    %122 = vmax.xlane.f32.xlu0 %v64
    %v123 = vpop.xlane.xlu0 %122
    %124 = vmax.xlane.f32.xlu0 %v65
    %v125 = vpop.xlane.xlu0 %124
    %126 = vmax.xlane.f32.xlu0 %v66
    %v127 = vpop.xlane.xlu0 %126
    %128 = vmax.xlane.f32.xlu0 %v67
    %v129 = vpop.xlane.xlu0 %128
    %130 = vmax.xlane.f32.xlu0 %v68
    %v131 = vpop.xlane.xlu0 %130
    %132 = vmax.xlane.f32.xlu0 %v69
    %v133 = vpop.xlane.xlu0 %132
    %v134 = vsub.f32 %v38, %v71
    %v135 = vsub.f32 %v39, %v73
    %v136 = vsub.f32 %v40, %v75
    %v137 = vsub.f32 %v41, %v77
    %v138 = vsub.f32 %v42, %v79
    %v139 = vsub.f32 %v43, %v81
    %v140 = vsub.f32 %v44, %v83
    %v141 = vsub.f32 %v45, %v85
    %v142 = vsub.f32 %v46, %v87
    %v143 = vsub.f32 %v47, %v89
    %v144 = vsub.f32 %v48, %v91
    %v145 = vsub.f32 %v49, %v93
    %v146 = vsub.f32 %v50, %v95
    %v147 = vsub.f32 %v51, %v97
    %v148 = vsub.f32 %v52, %v99
    %v149 = vsub.f32 %v53, %v101
    %v150 = vsub.f32 %v54, %v103
    %v151 = vsub.f32 %v55, %v105
    %v152 = vsub.f32 %v56, %v107
    %v153 = vsub.f32 %v57, %v109
    %v154 = vsub.f32 %v58, %v111
    %v155 = vsub.f32 %v59, %v113
    %v156 = vsub.f32 %v60, %v115
    %v157 = vsub.f32 %v61, %v117
    %v158 = vsub.f32 %v62, %v119
    %v159 = vsub.f32 %v63, %v121
    %v160 = vsub.f32 %v64, %v123
    %v161 = vsub.f32 %v65, %v125
    %v162 = vsub.f32 %v66, %v127
    %v163 = vsub.f32 %v67, %v129
    %v164 = vsub.f32 %v68, %v131
    %v165 = vsub.f32 %v69, %v133
    %v166 = vmul.f32 %v134, 1.442695
    %v167 = vpow.pop %v166
    %v168 = vmul.f32 %v135, 1.442695
    %v169 = vpow.pop %v168
    %v170 = vmul.f32 %v136, 1.442695
    %v171 = vpow.pop %v170
    %v172 = vmul.f32 %v137, 1.442695
    %v173 = vpow.pop %v172
    %v174 = vmul.f32 %v138, 1.442695
    %v175 = vpow.pop %v174
    %v176 = vmul.f32 %v139, 1.442695
    %v177 = vpow.pop %v176
    %v178 = vmul.f32 %v140, 1.442695
    %v179 = vpow.pop %v178
    %v180 = vmul.f32 %v141, 1.442695
    %v181 = vpow.pop %v180
    %v182 = vmul.f32 %v142, 1.442695
    %v183 = vpow.pop %v182
    %v184 = vmul.f32 %v143, 1.442695
    %v185 = vpow.pop %v184
    %v186 = vmul.f32 %v144, 1.442695
    %v187 = vpow.pop %v186
    %v188 = vmul.f32 %v145, 1.442695
    %v189 = vpow.pop %v188
    %v190 = vmul.f32 %v146, 1.442695
    %v191 = vpow.pop %v190
    %v192 = vmul.f32 %v147, 1.442695
    %v193 = vpow.pop %v192
    %v194 = vmul.f32 %v148, 1.442695
    %v195 = vpow.pop %v194
    %v196 = vmul.f32 %v149, 1.442695
    %v197 = vpow.pop %v196
    %v198 = vmul.f32 %v150, 1.442695
    %v199 = vpow.pop %v198
    %v200 = vmul.f32 %v151, 1.442695
    %v201 = vpow.pop %v200
    %v202 = vmul.f32 %v152, 1.442695
    %v203 = vpow.pop %v202
    %v204 = vmul.f32 %v153, 1.442695
    %v205 = vpow.pop %v204
    %v206 = vmul.f32 %v154, 1.442695
    %v207 = vpow.pop %v206
    %v208 = vmul.f32 %v155, 1.442695
    %v209 = vpow.pop %v208
    %v210 = vmul.f32 %v156, 1.442695
    %v211 = vpow.pop %v210
    %v212 = vmul.f32 %v157, 1.442695
    %v213 = vpow.pop %v212
    %v214 = vmul.f32 %v158, 1.442695
    %v215 = vpow.pop %v214
    %v216 = vmul.f32 %v159, 1.442695
    %v217 = vpow.pop %v216
    %v218 = vmul.f32 %v160, 1.442695
    %v219 = vpow.pop %v218
    %v220 = vmul.f32 %v161, 1.442695
    %v221 = vpow.pop %v220
    %v222 = vmul.f32 %v162, 1.442695
    %v223 = vpow.pop %v222
    %v224 = vmul.f32 %v163, 1.442695
    %v225 = vpow.pop %v224
    %v226 = vmul.f32 %v164, 1.442695
    %v227 = vpow.pop %v226
    %v228 = vmul.f32 %v165, 1.442695
    %v229 = vpow.pop %v228
    %230 = vadd.xlane.f32.xlu0 %v167
    %v231 = vpop.xlane.xlu0 %230
    %232 = vadd.xlane.f32.xlu0 %v169
    %v233 = vpop.xlane.xlu0 %232
    %234 = vadd.xlane.f32.xlu0 %v171
    %v235 = vpop.xlane.xlu0 %234
    %236 = vadd.xlane.f32.xlu0 %v173
    %v237 = vpop.xlane.xlu0 %236
    %238 = vadd.xlane.f32.xlu0 %v175
    %v239 = vpop.xlane.xlu0 %238
    %240 = vadd.xlane.f32.xlu0 %v177
    %v241 = vpop.xlane.xlu0 %240
    %242 = vadd.xlane.f32.xlu0 %v179
    %v243 = vpop.xlane.xlu0 %242
    %244 = vadd.xlane.f32.xlu0 %v181
    %v245 = vpop.xlane.xlu0 %244
    %246 = vadd.xlane.f32.xlu0 %v183
    %v247 = vpop.xlane.xlu0 %246
    %248 = vadd.xlane.f32.xlu0 %v185
    %v249 = vpop.xlane.xlu0 %248
    %250 = vadd.xlane.f32.xlu0 %v187
    %v251 = vpop.xlane.xlu0 %250
    %252 = vadd.xlane.f32.xlu0 %v189
    %v253 = vpop.xlane.xlu0 %252
    %254 = vadd.xlane.f32.xlu0 %v191
    %v255 = vpop.xlane.xlu0 %254
    %256 = vadd.xlane.f32.xlu0 %v193
    %v257 = vpop.xlane.xlu0 %256
    %258 = vadd.xlane.f32.xlu0 %v195
    %v259 = vpop.xlane.xlu0 %258
    %260 = vadd.xlane.f32.xlu0 %v197
    %v261 = vpop.xlane.xlu0 %260
    %262 = vadd.xlane.f32.xlu0 %v199
    %v263 = vpop.xlane.xlu0 %262
    %264 = vadd.xlane.f32.xlu0 %v201
    %v265 = vpop.xlane.xlu0 %264
    %266 = vadd.xlane.f32.xlu0 %v203
    %v267 = vpop.xlane.xlu0 %266
    %268 = vadd.xlane.f32.xlu0 %v205
    %v269 = vpop.xlane.xlu0 %268
    %270 = vadd.xlane.f32.xlu0 %v207
    %v271 = vpop.xlane.xlu0 %270
    %272 = vadd.xlane.f32.xlu0 %v209
    %v273 = vpop.xlane.xlu0 %272
    %274 = vadd.xlane.f32.xlu0 %v211
    %v275 = vpop.xlane.xlu0 %274
    %276 = vadd.xlane.f32.xlu0 %v213
    %v277 = vpop.xlane.xlu0 %276
    %278 = vadd.xlane.f32.xlu0 %v215
    %v279 = vpop.xlane.xlu0 %278
    %280 = vadd.xlane.f32.xlu0 %v217
    %v281 = vpop.xlane.xlu0 %280
    %282 = vadd.xlane.f32.xlu0 %v219
    %v283 = vpop.xlane.xlu0 %282
    %284 = vadd.xlane.f32.xlu0 %v221
    %v285 = vpop.xlane.xlu0 %284
    %286 = vadd.xlane.f32.xlu0 %v223
    %v287 = vpop.xlane.xlu0 %286
    %288 = vadd.xlane.f32.xlu0 %v225
    %v289 = vpop.xlane.xlu0 %288
    %290 = vadd.xlane.f32.xlu0 %v227
    %v291 = vpop.xlane.xlu0 %290
    %292 = vadd.xlane.f32.xlu0 %v229
    %v293 = vpop.xlane.xlu0 %292
    %v294 = vlog2.pop %v231
    %v295 = vmul.f32 %v294, 0.6931472
    %v296 = vlog2.pop %v233
    %v297 = vmul.f32 %v296, 0.6931472
    %v298 = vlog2.pop %v235
    %v299 = vmul.f32 %v298, 0.6931472
    %v300 = vlog2.pop %v237
    %v301 = vmul.f32 %v300, 0.6931472
    %v302 = vlog2.pop %v239
    %v303 = vmul.f32 %v302, 0.6931472
    %v304 = vlog2.pop %v241
    %v305 = vmul.f32 %v304, 0.6931472
    %v306 = vlog2.pop %v243
    %v307 = vmul.f32 %v306, 0.6931472
    %v308 = vlog2.pop %v245
    %v309 = vmul.f32 %v308, 0.6931472
    %v310 = vlog2.pop %v247
    %v311 = vmul.f32 %v310, 0.6931472
    %v312 = vlog2.pop %v249
    %v313 = vmul.f32 %v312, 0.6931472
    %v314 = vlog2.pop %v251
    %v315 = vmul.f32 %v314, 0.6931472
    %v316 = vlog2.pop %v253
    %v317 = vmul.f32 %v316, 0.6931472
    %v318 = vlog2.pop %v255
    %v319 = vmul.f32 %v318, 0.6931472
    %v320 = vlog2.pop %v257
    %v321 = vmul.f32 %v320, 0.6931472
    %v322 = vlog2.pop %v259
    %v323 = vmul.f32 %v322, 0.6931472
    %v324 = vlog2.pop %v261
    %v325 = vmul.f32 %v324, 0.6931472
    %v326 = vlog2.pop %v263
    %v327 = vmul.f32 %v326, 0.6931472
    %v328 = vlog2.pop %v265
    %v329 = vmul.f32 %v328, 0.6931472
    %v330 = vlog2.pop %v267
    %v331 = vmul.f32 %v330, 0.6931472
    %v332 = vlog2.pop %v269
    %v333 = vmul.f32 %v332, 0.6931472
    %v334 = vlog2.pop %v271
    %v335 = vmul.f32 %v334, 0.6931472
    %v336 = vlog2.pop %v273
    %v337 = vmul.f32 %v336, 0.6931472
    %v338 = vlog2.pop %v275
    %v339 = vmul.f32 %v338, 0.6931472
    %v340 = vlog2.pop %v277
    %v341 = vmul.f32 %v340, 0.6931472
    %v342 = vlog2.pop %v279
    %v343 = vmul.f32 %v342, 0.6931472
    %v344 = vlog2.pop %v281
    %v345 = vmul.f32 %v344, 0.6931472
    %v346 = vlog2.pop %v283
    %v347 = vmul.f32 %v346, 0.6931472
    %v348 = vlog2.pop %v285
    %v349 = vmul.f32 %v348, 0.6931472
    %v350 = vlog2.pop %v287
    %v351 = vmul.f32 %v350, 0.6931472
    %v352 = vlog2.pop %v289
    %v353 = vmul.f32 %v352, 0.6931472
    %v354 = vlog2.pop %v291
    %v355 = vmul.f32 %v354, 0.6931472
    %v356 = vlog2.pop %v293
    %v357 = vmul.f32 %v356, 0.6931472
    %v358 = vadd.f32 %v71, %v295
    %v359 = vadd.f32 %v73, %v297
    %v360 = vadd.f32 %v75, %v299
    %v361 = vadd.f32 %v77, %v301
    %v362 = vadd.f32 %v79, %v303
    %v363 = vadd.f32 %v81, %v305
    %v364 = vadd.f32 %v83, %v307
    %v365 = vadd.f32 %v85, %v309
    %v366 = vadd.f32 %v87, %v311
    %v367 = vadd.f32 %v89, %v313
    %v368 = vadd.f32 %v91, %v315
    %v369 = vadd.f32 %v93, %v317
    %v370 = vadd.f32 %v95, %v319
    %v371 = vadd.f32 %v97, %v321
    %v372 = vadd.f32 %v99, %v323
    %v373 = vadd.f32 %v101, %v325
    %v374 = vadd.f32 %v103, %v327
    %v375 = vadd.f32 %v105, %v329
    %v376 = vadd.f32 %v107, %v331
    %v377 = vadd.f32 %v109, %v333
    %v378 = vadd.f32 %v111, %v335
    %v379 = vadd.f32 %v113, %v337
    %v380 = vadd.f32 %v115, %v339
    %v381 = vadd.f32 %v117, %v341
    %v382 = vadd.f32 %v119, %v343
    %v383 = vadd.f32 %v121, %v345
    %v384 = vadd.f32 %v123, %v347
    %v385 = vadd.f32 %v125, %v349
    %v386 = vadd.f32 %v127, %v351
    %v387 = vadd.f32 %v129, %v353
    %v388 = vadd.f32 %v131, %v355
    %v389 = vadd.f32 %v133, %v357
    %v390 = vld [vmem:[#allocation5] sm:$0x3]
    %v392 = vlaneseq
    %v393 = vshrl.u32 %v392, 7
    %v394 = vsub.s32 0, %v393
    %v395 = vrot.slane %v390, %v394
    %v396 = vlaneseq
    %v397 = vshrl.u32 %v396, 7
    %v398 = vsub.s32 1, %v397
    %v399 = vrot.slane %v390, %v398
    %402 = vmatprep.subr.mxu0 0.0
    %403 = vmatpush1.msra.mxu0 %v373
    %404 = vmatprep.subr.mxu0 0.0
    %405 = vmatpush1.msra.mxu0 %v372
    %406 = vmatprep.subr.mxu0 0.0
    %407 = vmatpush1.msra.mxu0 %v371
    %408 = vmatprep.subr.mxu0 0.0
    %409 = vmatpush1.msra.mxu0 %v370
    %410 = vmatprep.subr.mxu0 0.0
    %411 = vmatpush1.msra.mxu0 %v369
    %412 = vmatprep.subr.mxu0 0.0
    %413 = vmatpush1.msra.mxu0 %v368
    %414 = vmatprep.subr.mxu0 0.0
    %415 = vmatpush1.msra.mxu0 %v367
    %416 = vmatprep.subr.mxu0 0.0
    %417 = vmatpush1.msra.mxu0 %v366
    %418 = vmatprep.subr.mxu0 0.0
    %419 = vmatpush1.msra.mxu0 %v365
    %420 = vmatprep.subr.mxu0 0.0
    %421 = vmatpush1.msra.mxu0 %v364
    %422 = vmatprep.subr.mxu0 0.0
    %423 = vmatpush1.msra.mxu0 %v363
    %424 = vmatprep.subr.mxu0 0.0
    %425 = vmatpush1.msra.mxu0 %v362
    %426 = vmatprep.subr.mxu0 0.0
    %427 = vmatpush1.msra.mxu0 %v361
    %428 = vmatprep.subr.mxu0 0.0
    %429 = vmatpush1.msra.mxu0 %v360
    %430 = vmatprep.subr.mxu0 0.0
    %431 = vmatpush1.msra.mxu0 %v359
    %432 = vmatprep.subr.mxu0 0.0
    %433 = vmatpush1.msra.mxu0 %v358
    %434 = vmatprep.subr.mxu0 0.0
    %435 = vmatpush2.msra.mxu0 %v389
    %436 = vmatprep.subr.mxu0 0.0
    %437 = vmatpush2.msra.mxu0 %v388
    %438 = vmatprep.subr.mxu0 0.0
    %439 = vmatpush2.msra.mxu0 %v387
    %440 = vmatprep.subr.mxu0 0.0
    %441 = vmatpush2.msra.mxu0 %v386
    %442 = vmatprep.subr.mxu0 0.0
    %443 = vmatpush2.msra.mxu0 %v385
    %444 = vmatprep.subr.mxu0 0.0
    %445 = vmatpush2.msra.mxu0 %v384
    %446 = vmatprep.subr.mxu0 0.0
    %447 = vmatpush2.msra.mxu0 %v383
    %448 = vmatprep.subr.mxu0 0.0
    %449 = vmatpush2.msra.mxu0 %v382
    %450 = vmatprep.subr.mxu0 0.0
    %451 = vmatpush2.msra.mxu0 %v381
    %452 = vmatprep.subr.mxu0 0.0
    %453 = vmatpush2.msra.mxu0 %v380
    %454 = vmatprep.subr.mxu0 0.0
    %455 = vmatpush2.msra.mxu0 %v379
    %456 = vmatprep.subr.mxu0 0.0
    %457 = vmatpush2.msra.mxu0 %v378
    %458 = vmatprep.subr.mxu0 0.0
    %459 = vmatpush2.msra.mxu0 %v377
    %460 = vmatprep.subr.mxu0 0.0
    %461 = vmatpush2.msra.mxu0 %v376
    %462 = vmatprep.subr.mxu0 0.0
    %463 = vmatpush2.msra.mxu0 %v375
    %464 = vmatprep.subr.mxu0 0.0
    %465 = vmatpush2.msra.mxu0 %v374
    %466 = vmatprep.mubr.f32.mxu0 %v399
    %467 = vmatmul.mubr.f32.gmra.mxu0 %v395
    %v468 = vpop.f32.mrf.mxu0
    %v469 = vadd.f32 0.0, %v468
    %v470 = vpop.f32.mrf.mxu0
    %471 = vdwg.mxu0
    %473 = vset.pattern.permute.xlu0 0
    %474 = vperm.xlu0 %473, %v469
    %v475 = vpop.permute.xlu0 %474
    %477 = vst [vmem:[#allocation7] sm:$0x1] %v475
    // Predicated region
    $region18: #{tpu_custom_call.1} parent=1 // pred_check
      _
    $region19: #{tpu_custom_call.1} parent=1 // pred_check_branch
      %479 = sbr.rel (0) target = $region21
    $region20: #{tpu_custom_call.1} parent=1 // pred_region
      %s481 = ssub.s32 16, 16
      %482 = vsyncadd [#allocation4], %s481
      %s484 = sshll.u32 [#allocation7], 4
      %s485 = int_to_ptr.vmem [resolvable:$true] %s484
      %487 = dma.vmem_to_hbm [thread:$0]  %s485, 16, %s2, [#allocation4]
    $region21: #{tpu_custom_call.1} parent=1 // pred_fallthru
      _
    // Predicated region
    $region22: #{tpu_custom_call.1} parent=1 // pred_check
      _
    $region23: #{tpu_custom_call.1} parent=1 // pred_check_branch
      %489 = sbr.rel (0) target = $region25
    $region24: #{tpu_custom_call.1} parent=1 // pred_region
      %490 = dma.done [#allocation4], 16
    $region25: #{tpu_custom_call.1} parent=1 // pred_fallthru
      _
    %491 = vsyncpa [#allocation3], 1
    %492 = vsyncpa [#allocation6], 1
    %493 = vsyncpa [#allocation4], 1

</llo_original>
